<compile_context>
chip_gen: v6e
topology: v6e:2x2x1
jax: 0.10.0
libtpu: 0.0.40
codegen_flags: <defaults>
</compile_context>

<pallas_src>
import math
import numpy as np
import jax
import jax.numpy as jnp
from jax.experimental import pallas as pl
from jax.experimental.pallas import tpu as pltpu


def _round_up(x, m):
    return ((x + m - 1) // m) * m


def _fused_kernel(w_ref, b_ref, x_ref, o_ref):
    # Single MXU contraction (tl, n_taps*Cin) @ (n_taps*Cin, N_pad), f32 acc.
    acc = jnp.dot(x_ref[...], w_ref[...], preferred_element_type=jnp.float32)
    o_ref[...] = (acc + b_ref[...]).astype(o_ref.dtype)   # bias folded into store


def _vmem_capacity_bytes():
    try:
        cap = int(getattr(pltpu.get_tpu_info(), "vmem_capacity_bytes"))
        if cap > 0:
            return cap
    except Exception:
        pass
    return 64 * 1024 * 1024          # conservative fallback (v7x per-TC VMEM)


def _pick_time_tile(requested, lp_min, cin2, n_pad, in_bytes, out_bytes, budget):
    """Largest multiple-of-8 time tile <= requested whose VMEM footprint fits."""
    tl = max(8, (int(requested) // 8) * 8)
    tl = min(tl, _round_up(lp_min, 8))          # never tile past the padded length
    fixed = cin2 * n_pad * in_bytes * 2 + n_pad * 4 * 2   # resident W (2 bufs) + bias
    while True:
        per_tl = tl * (cin2 * in_bytes + n_pad * out_bytes) * 2   # dbl-buffered x & out
        if fixed + per_tl <= budget or tl <= 8:
            return tl, fixed + per_tl
        tl = max(8, ((tl // 2) // 8) * 8)


def encodec_conv_transpose1d(x_ncl, v, g, bias, *, stride, causal=True,
                             trim_right_ratio=1.0, time_tile=1024,
                             use_bf16=True):
    """Forward of EncodecConvTranspose1d with norm_type='weight_norm'.

    x_ncl: (B, C_in, L) float32   (PyTorch NCL layout)
    v    : (C_in, C_out, K)       weight_norm direction tensor
    g    : (C_in, 1, 1)           weight_norm magnitude
    bias : (C_out,)
    """
    # TODO(synk): 'time_group_norm' branch not implemented (config here uses 'weight_norm').
    B, Cin, L = x_ncl.shape
    _, Cout, K = v.shape
    n_taps = -(-K // stride)                  # ceil(K / stride); == 2 for Encodec
    Cin2 = n_taps * Cin

    padding_total = K - stride
    if causal:
        padding_right = math.ceil(padding_total * trim_right_ratio)
    else:
        padding_right = padding_total // 2
    padding_left = padding_total - padding_right
    L_out = (L - 1) * stride + K
    L_final = L_out - padding_left - padding_right            # == L * stride

    # Lane-dense output: pad Cout so N_pad = stride * Cout_pad is a multiple of 128.
    # (No-op for stock Encodec decoder shapes; padded channels are zero & sliced off.)
    lane_unit = 128 // math.gcd(stride, 128)
    Cout_pad = _round_up(Cout, lane_unit)
    N_pad = stride * Cout_pad

    # ---- weight norm + tap regrouping + fusion (tiny; once, in the wrapper) ----
    v32 = v.astype(jnp.float32)
    norm = jnp.sqrt(jnp.sum(v32 * v32, axis=(1, 2), keepdims=True))   # (Cin,1,1)
    w = g.astype(jnp.float32) * v32 / norm                            # (Cin,Cout,K)
    w = jnp.pad(w, ((0, 0), (0, Cout_pad - Cout), (0, n_taps * stride - K)))
    w = w.reshape(Cin, Cout_pad, n_taps, stride)
    # W_fused[j*Cin + cin, p*Cout_pad + c] = w[cin, c, j*stride + p]
    W_fused = jnp.transpose(w, (2, 0, 3, 1)).reshape(Cin2, N_pad)
    bias_phase = jnp.tile(jnp.pad(bias.astype(jnp.float32), (0, Cout_pad - Cout)),
                          stride).reshape(1, N_pad)

    mm_dtype = jnp.bfloat16 if use_bf16 else jnp.float32
    out_dtype = jnp.bfloat16 if use_bf16 else jnp.float32
    in_bytes = 2 if use_bf16 else 4
    out_bytes = 2 if use_bf16 else 4

    # ---- VMEM-aware time tiling -------------------------------------------
    Lp_min = L + n_taps - 1                    # frames needed (incl. shifted tail)
    vmem_cap = _vmem_capacity_bytes()
    tl, footprint = _pick_time_tile(time_tile, Lp_min, Cin2, N_pad,
                                    in_bytes, out_bytes, int(vmem_cap * 0.7))
    Lp = _round_up(Lp_min, tl)
    num_t = Lp // tl
    vmem_limit = int(min(vmem_cap * 0.9,
                         max(32 * 1024 * 1024, footprint + 16 * 1024 * 1024)))

    # ---- shifted x copies, concatenated along channels (bf16 before pad) ---
    x_blc = jnp.transpose(x_ncl, (0, 2, 1)).astype(mm_dtype)          # (B, L, Cin)
    x_cat = jnp.concatenate(
        [jnp.pad(x_blc, ((0, 0), (j, Lp - L - j), (0, 0))) for j in range(n_taps)],
        axis=-1)                                                       # (B, Lp, Cin2)
    W_in = W_fused.astype(mm_dtype)

    # ---- pallas call --------------------------------------------------------
    y_phase = pl.pallas_call(
        _fused_kernel,
        out_shape=jax.ShapeDtypeStruct((B, Lp, N_pad), out_dtype),
        grid=(B, num_t),
        in_specs=[
            pl.BlockSpec((Cin2, N_pad), lambda b, i: (0, 0)),   # grid-invariant W
            pl.BlockSpec((1, N_pad), lambda b, i: (0, 0)),      # grid-invariant bias
            pl.BlockSpec((None, tl, Cin2), lambda b, i: (b, i, 0)),
        ],
        out_specs=pl.BlockSpec((None, tl, N_pad), lambda b, i: (b, i, 0)),
        compiler_params=pltpu.CompilerParams(
            dimension_semantics=("parallel", "parallel"),
            vmem_limit_bytes=vmem_limit,
        ),
    )(W_in, bias_phase, x_cat)

    # ---- phase de-interleave + causal trim + channel un-pad + NCL transpose
    y_flat = y_phase.reshape(B, Lp * stride, Cout_pad)
    y_trim = y_flat[:, padding_left:padding_left + L_final, :Cout]
    return jnp.transpose(y_trim, (0, 2, 1)).astype(x_ncl.dtype)       # (B, Cout, L*stride)


def _reference(x_ncl, v, g, bias, stride, causal=True, trim_right_ratio=1.0):
    """Pure numpy reference following the PyTorch definition."""
    x = np.asarray(x_ncl, np.float64)
    v = np.asarray(v, np.float64)
    g = np.asarray(g, np.float64)
    bias = np.asarray(bias, np.float64)
    Cin, Cout, K = v.shape
    norm = np.sqrt(np.sum(v * v, axis=(1, 2), keepdims=True))
    w = g * v / norm
    B, _, L = x.shape
    L_out = (L - 1) * stride + K
    y = np.zeros((B, Cout, L_out))
    for b in range(B):
        for l in range(L):
            for k in range(K):
                y[b, :, l * stride + k] += x[b, :, l] @ w[:, :, k]
    y += bias[None, :, None]
    padding_total = K - stride
    pr = math.ceil(padding_total * trim_right_ratio) if causal else padding_total // 2
    pleft = padding_total - pr
    return y[:, :, pleft:L_out - pr]


if __name__ == "__main__":
    # small shapes: batch=2, in_channels=4, out_channels=8, length=16,
    # kernel_size=4, stride=2 (Encodec-style kernel_size = 2*stride)
    B, Cin, Cout, L, K, stride = 2, 4, 8, 16, 4, 2

    key = jax.random.PRNGKey(0)
    k1, k2, k3, k4 = jax.random.split(key, 4)
    x = jax.random.normal(k1, (B, Cin, L), jnp.float32)
    v = jax.random.normal(k2, (Cin, Cout, K), jnp.float32) * 0.1
    g = jax.random.uniform(k3, (Cin, 1, 1), jnp.float32, minval=0.5, maxval=1.5)
    bias = jax.random.normal(k4, (Cout,), jnp.float32) * 0.01

    # small time_tile so the (batch, time) grid is actually exercised here
    y = encodec_conv_transpose1d(x, v, g, bias, stride=stride,
                                 causal=True, trim_right_ratio=1.0,
                                 time_tile=8)
    y = jax.block_until_ready(y)

    y_ref = _reference(x, v, g, bias, stride, causal=True, trim_right_ratio=1.0)
    assert y.shape == y_ref.shape, (y.shape, y_ref.shape)
    # bf16 MXU inputs + bf16 phase-packed stores (f32 accumulation) -> loosened tolerance
    np.testing.assert_allclose(np.asarray(y), y_ref, atol=4e-2, rtol=4e-2)
    print("KERNEL_OK")
</pallas_src>

<mosaic_0001>
module attributes {stable_mosaic.version = 11 : i64} {
  func.func @_fused_kernel(%arg0: i32, %arg1: i32, %arg2: memref<8x128xbf16, #tpu.memory_space<vmem>>, %arg3: memref<1x128xf32, #tpu.memory_space<vmem>>, %arg4: memref<1x8x8xbf16, #tpu.memory_space<vmem>>, %arg5: memref<1x8x128xbf16, #tpu.memory_space<vmem>>) attributes {dimension_semantics = [#tpu.dimension_semantics<parallel>, #tpu.dimension_semantics<parallel>], iteration_bounds = array<i64: 2, 3>, scalar_prefetch = 0 : i64, scratch_operands = 0 : i64, tpu.core_type = #tpu.core_type<tc>, window_params = [{pipeline_mode = #tpu.pipeline_mode<synchronous>, transform_indices = @transform_0, window_bounds = array<i64: 8, 128>}, {pipeline_mode = #tpu.pipeline_mode<synchronous>, transform_indices = @transform_1, window_bounds = array<i64: 1, 128>}, {transform_indices = @transform_2, window_bounds = array<i64: 1, 8, 8>}, {transform_indices = @transform_3, window_bounds = array<i64: 1, 8, 128>}]} {
    %c0 = arith.constant 0 : index
    %c0_0 = arith.constant 0 : index
    %c0_1 = arith.constant 0 : index
    %0 = vector.load %arg4[%c0, %c0_0, %c0_1] : memref<1x8x8xbf16, #tpu.memory_space<vmem>>, vector<1x8x8xbf16>
    %1 = vector.shape_cast %0 : vector<1x8x8xbf16> to vector<8x8xbf16>
    %c0_2 = arith.constant 0 : index
    %c0_3 = arith.constant 0 : index
    %2 = vector.load %arg2[%c0_2, %c0_3] : memref<8x128xbf16, #tpu.memory_space<vmem>>, vector<8x128xbf16>
    %cst = arith.constant dense<0.000000e+00> : vector<8x128xf32>
    %3 = tpu.matmul %1, %2, %cst {dimension_numbers = #tpu.dot_dimension_numbers<[1], [0], [0], [1], [0, 0, 1, 1], [], []>} : vector<8x8xbf16>, vector<8x128xbf16>, vector<8x128xf32> -> vector<8x128xf32>
    %c0_4 = arith.constant 0 : index
    %c0_5 = arith.constant 0 : index
    %4 = vector.load %arg3[%c0_4, %c0_5] : memref<1x128xf32, #tpu.memory_space<vmem>>, vector<1x128xf32>
    %5 = vector.broadcast %4 : vector<1x128xf32> to vector<8x128xf32>
    %6 = arith.addf %3, %5 : vector<8x128xf32>
    %7 = arith.truncf %6 : vector<8x128xf32> to vector<8x128xbf16>
    %c0_6 = arith.constant 0 : index
    %c0_7 = arith.constant 0 : index
    %c0_8 = arith.constant 0 : index
    %8 = vector.load %arg5[%c0_6, %c0_7, %c0_8] : memref<1x8x128xbf16, #tpu.memory_space<vmem>>, vector<1x8x128xbf16>
    %9 = vector.shape_cast %8 : vector<1x8x128xbf16> to vector<8x128xbf16>
    %10 = vector.shape_cast %7 : vector<8x128xbf16> to vector<1x8x128xbf16>
    tpu.vector_store %arg5[%c0_6, %c0_7, %c0_8], %10 {strides = array<i32>} : memref<1x8x128xbf16, #tpu.memory_space<vmem>>, vector<1x8x128xbf16>,
    return
  }
  func.func @transform_0(%arg0: i32, %arg1: i32) -> (i32, i32) {
    %c0_i32 = arith.constant 0 : i32
    %c0_i32_0 = arith.constant 0 : i32
    %c0_i32_1 = arith.constant 0 : i32
    return %c0_i32, %c0_i32_0 : i32, i32
  }
  func.func @transform_1(%arg0: i32, %arg1: i32) -> (i32, i32) {
    %c0_i32 = arith.constant 0 : i32
    %c0_i32_0 = arith.constant 0 : i32
    %c0_i32_1 = arith.constant 0 : i32
    return %c0_i32, %c0_i32_0 : i32, i32
  }
  func.func @transform_2(%arg0: i32, %arg1: i32) -> (i32, i32, i32) {
    %c0_i32 = arith.constant 0 : i32
    %c0_i32_0 = arith.constant 0 : i32
    return %arg0, %arg1, %c0_i32 : i32, i32, i32
  }
  func.func @transform_3(%arg0: i32, %arg1: i32) -> (i32, i32, i32) {
    %c0_i32 = arith.constant 0 : i32
    %c0_i32_0 = arith.constant 0 : i32
    return %arg0, %arg1, %c0_i32 : i32, i32, i32
  }
}

</mosaic_0001>

<llo_original>
// kernel: tpu_custom_call.1
$region0: #{tpu_custom_call.1}
  #allocation0 [shape = 'u32[]', space=smem, size = 0x4, offset = 0x4, fixed_abs, tag = 'smem constant byte address 0x4 - core index']
  #allocation1 [shape = 'u32[144,128]{1,0:T(1,128)}', space=vmem, size = 0x12000, scoped, tag = 'internal scratch']
  %s0 = inlined_call_operand.vmem [shape: bf16[8,128], index: 0, kind: input, shape index: {}]
  %s1 = inlined_call_operand.vmem [shape: f32[1,128], index: 1, kind: input, shape index: {}]
  %s2 = inlined_call_operand.vmem [shape: bf16[2,24,8], index: 2, kind: input, shape index: {}]
  %s3 = inlined_call_operand.hbm [shape: bf16[2,24,128], index: 3, kind: output, shape index: {}]
  %s4 = sld [smem:[#allocation0]]
  $region45: #{tpu_custom_call.1} parent=0
    _
  %s6 = ssub.s32 1, %s4
  %s7 = scalar_select 0, %s6, %s4
  $region1: #{tpu_custom_call.1} parent=0
    #allocation2 [shape = 'u8[4096]{0}', space=vmem, size = 0x1000, scoped, tag = 'output window, operand 0']
    #allocation3 [shape = 's32[2]{0}', space=sflag, size = 0x8, scoped, tag = 'scoped memory for tpu_custom_call.1']
    %8 = vsyncpa [#allocation3], 0
    %s9 = scalar_lea.sflag [#allocation3], 1
    %10 = vsyncpa %s9, 0
    loop: start=0, step=1, limit=8
    $region2: #{tpu_custom_call.1} parent=1 // loop_pre_header
      _
    $region3: #{tpu_custom_call.1} parent=1 // loop_header
      %s12 = sphi 0, %s16
      %p13 = scmp.ge.s32.totalorder %s12, 8
      %s19 = sphi 0, %s31
      %s20 = sphi 0, %s27
      %s21 = sphi 0, %s19
      %s22 = sphi 0, %s20
      %s23 = sphi 0, %s21
      %s24 = sphi 0, %s22
      %s32 = sphi 0, %s32
      %s34 = sphi 0, %s32
      %s35 = sphi 0, %s34
      %s49 = sphi 0, %s35
      %s53 = sphi 0, %s53
      %s55 = sphi 0, %s53
      %s56 = sphi 0, %s55
      %s70 = sphi 0, %s56
      %s78 = sphi 0, %s80
      %s81 = sphi 0, %s78
      %s82 = sphi 0, %s81
      %s98 = sphi 0, %s82
      %s106 = sphi 0, %s108
      %s109 = sphi 0, %s106
      %s110 = sphi 0, %s109
      %s126 = sphi 0, %s110
    $region4: #{tpu_custom_call.1} parent=1 // loop_header_branch
      %15 = sbr.rel (%p13) target = $region8
    $region5: #{tpu_custom_call.1} parent=1 // loop_body
      %s17 = ssub.s32 %s12, 1
      %s18 = ssub.s32 %s12, 2
      %s25 = sadd.s32 1, %s20
      %p26 = scmp.ge.s32.totalorder %s25, 3
      %s27 = scalar_select %p26, 0, %s25
      %s28 = sadd.s32 1, %s19
      %s29 = scalar_select %p26, %s28, %s19
      %p30 = scmp.ge.s32.totalorder %s29, 2
      %s31 = scalar_select %p30, 0, %s29
      %s33 = sadd.s32 %s32, 1
      %p36 = scmp.eq.s32.totalorder %s12, 5
      %p37 = scmp.ne.s32.totalorder %s32, %s34
      %p38 = scmp.eq.s32.totalorder %s12, 0
      %p39 = por %p37, %p38
      %p40 = scmp.ne.s32.totalorder %s32, %s34
      %p41 = scmp.eq.s32.totalorder %s17, 5
      %p42 = por %p40, %p41
      %p43 = scmp.ne.s32.totalorder %s34, %s35
      %p44 = scmp.eq.s32.totalorder %s17, 0
      %p45 = por %p43, %p44
      %p46 = scmp.ne.s32.totalorder %s34, %s35
      %p47 = scmp.eq.s32.totalorder %s18, 5
      %p48 = por %p46, %p47
      %p50 = scmp.ne.s32.totalorder %s35, %s49
      %p51 = scmp.eq.s32.totalorder %s18, 0
      %p52 = por %p50, %p51
      %s54 = sadd.s32 %s53, 1
      %p57 = scmp.eq.s32.totalorder %s12, 5
      %p58 = scmp.ne.s32.totalorder %s53, %s55
      %p59 = scmp.eq.s32.totalorder %s12, 0
      %p60 = por %p58, %p59
      %p61 = scmp.ne.s32.totalorder %s53, %s55
      %p62 = scmp.eq.s32.totalorder %s17, 5
      %p63 = por %p61, %p62
      %p64 = scmp.ne.s32.totalorder %s55, %s56
      %p65 = scmp.eq.s32.totalorder %s17, 0
      %p66 = por %p64, %p65
      %p67 = scmp.ne.s32.totalorder %s55, %s56
      %p68 = scmp.eq.s32.totalorder %s18, 5
      %p69 = por %p67, %p68
      %p71 = scmp.ne.s32.totalorder %s56, %s70
      %p72 = scmp.eq.s32.totalorder %s18, 0
      %p73 = por %p71, %p72
      %s74 = ssub.s32 %s19, %s31
      %s75 = ssub.s32 %s20, %s27
      %s76 = sor.u32 %s74, %s75
      %p77 = scmp.eq.s32.totalorder %s76, 0
      %s79 = sadd.s32 %s78, 1
      %s80 = scalar_select %p77, %s78, %s79
      %p83 = pneg %p77
      %p84 = scmp.eq.s32.totalorder %s12, 5
      %p85 = por %p83, %p84
      %p86 = scmp.ne.s32.totalorder %s78, %s81
      %p87 = scmp.eq.s32.totalorder %s12, 0
      %p88 = por %p86, %p87
      %p89 = scmp.ne.s32.totalorder %s78, %s81
      %p90 = scmp.eq.s32.totalorder %s17, 5
      %p91 = por %p89, %p90
      %p92 = scmp.ne.s32.totalorder %s81, %s82
      %p93 = scmp.eq.s32.totalorder %s17, 0
      %p94 = por %p92, %p93
      %p95 = scmp.ne.s32.totalorder %s81, %s82
      %p96 = scmp.eq.s32.totalorder %s18, 5
      %p97 = por %p95, %p96
      %p99 = scmp.ne.s32.totalorder %s82, %s98
      %p100 = scmp.eq.s32.totalorder %s18, 0
      %p101 = por %p99, %p100
      %s102 = ssub.s32 %s19, %s31
      %s103 = ssub.s32 %s20, %s27
      %s104 = sor.u32 %s102, %s103
      %p105 = scmp.eq.s32.totalorder %s104, 0
      %s107 = sadd.s32 %s106, 1
      %s108 = scalar_select %p105, %s106, %s107
      %p111 = pneg %p105
      %p112 = scmp.eq.s32.totalorder %s12, 5
      %p113 = por %p111, %p112
      %p114 = scmp.ne.s32.totalorder %s106, %s109
      %p115 = scmp.eq.s32.totalorder %s12, 0
      %p116 = por %p114, %p115
      %p117 = scmp.ne.s32.totalorder %s106, %s109
      %p118 = scmp.eq.s32.totalorder %s17, 5
      %p119 = por %p117, %p118
      %p120 = scmp.ne.s32.totalorder %s109, %s110
      %p121 = scmp.eq.s32.totalorder %s17, 0
      %p122 = por %p120, %p121
      %p123 = scmp.ne.s32.totalorder %s109, %s110
      %p124 = scmp.eq.s32.totalorder %s18, 5
      %p125 = por %p123, %p124
      %p127 = scmp.ne.s32.totalorder %s110, %s126
      %p128 = scmp.eq.s32.totalorder %s18, 0
      %p129 = por %p127, %p128
      %p130 = scmp.le.s32.totalorder 1, %s12
      %p131 = scmp.lt.s32.totalorder %s12, 7
      %p132 = pnand %p130, %p131
      %p133 = pneg %p132
      // Predicated region
      $region9: #{tpu_custom_call.1} parent=5 // pred_check
        _
      $region10: #{tpu_custom_call.1} parent=5 // pred_check_branch
        %135 = sbr.rel (%p132) target = $region12
      $region11: #{tpu_custom_call.1} parent=5 // pred_region
        %s136 = ssub.s32 %s12, 1
        // Predicated region
        $region13: #{tpu_custom_call.1} parent=11 // pred_check
          %p137 = pneg %p45
        $region14: #{tpu_custom_call.1} parent=11 // pred_check_branch
          %139 = sbr.rel (%p137) target = $region16
        $region15: #{tpu_custom_call.1} parent=11 // pred_region
          _
        $region16: #{tpu_custom_call.1} parent=11 // pred_fallthru
          _
        // Predicated region
        $region17: #{tpu_custom_call.1} parent=11 // pred_check
          %p140 = pneg %p66
        $region18: #{tpu_custom_call.1} parent=11 // pred_check_branch
          %142 = sbr.rel (%p140) target = $region20
        $region19: #{tpu_custom_call.1} parent=11 // pred_region
          _
        $region20: #{tpu_custom_call.1} parent=11 // pred_fallthru
          _
      $region12: #{tpu_custom_call.1} parent=5 // pred_fallthru
        _
      %p143 = scmp.lt.s32.totalorder %s12, 6
      // Predicated region
      $region21: #{tpu_custom_call.1} parent=5 // pred_check
        %p144 = pneg %p143
      $region22: #{tpu_custom_call.1} parent=5 // pred_check_branch
        %146 = sbr.rel (%p144) target = $region24
      $region23: #{tpu_custom_call.1} parent=5 // pred_region
        // Predicated region
        $region25: #{tpu_custom_call.1} parent=23 // pred_check
          %p147 = pneg %p88
        $region26: #{tpu_custom_call.1} parent=23 // pred_check_branch
          %149 = sbr.rel (%p147) target = $region28
        $region27: #{tpu_custom_call.1} parent=23 // pred_region
          %p150 = scmp.lt.s32.totalorder %s19, 1
          %s151 = scalar_select %p150, %s19, 1
          %p152 = scmp.lt.s32.totalorder %s20, 2
          %s153 = scalar_select %p152, %s20, 2
          %s154 = smul.addr %s151, 3
          %s155 = sadd.s32 %s153, %s154
          %s156 = smul.addr %s155, 4
          %s157 = scalar_lea.vmem %s2, %s156
        $region28: #{tpu_custom_call.1} parent=23 // pred_fallthru
          _
      $region24: #{tpu_custom_call.1} parent=5 // pred_fallthru
        _
      %p158 = scmp.le.s32.totalorder 1, %s12
      %p159 = scmp.lt.s32.totalorder %s12, 7
      %p160 = pnand %p158, %p159
      %p161 = pneg %p160
      // Predicated region
      $region29: #{tpu_custom_call.1} parent=5 // pred_check
        _
      $region30: #{tpu_custom_call.1} parent=5 // pred_check_branch
        %163 = sbr.rel (%p160) target = $region32
      $region31: #{tpu_custom_call.1} parent=5 // pred_region
        %s164 = ssub.s32 %s12, 1
        %p165 = pneg %p45
        %p166 = pneg %p42
        %p167 = pneg %p66
        %p168 = pneg %p63
        %p169 = scmp.lt.s32.totalorder %s21, 1
        %s170 = scalar_select %p169, %s21, 1
        %p171 = scmp.lt.s32.totalorder %s22, 2
        %s172 = scalar_select %p171, %s22, 2
        %s173 = smul.addr %s170, 3
        %s174 = sadd.s32 %s172, %s173
        %s175 = smul.addr %s174, 4
        %s176 = scalar_lea.vmem %s2, %s175
        %p177 = pneg %p94
        %p178 = pneg %p91
        %p179 = pneg %p122
        %p180 = pneg %p119
        %s181 = sand.u32 %s109, 1
        %s182 = scalar_lea.sflag [#allocation3], %s181
        %s183 = sand.u32 %s109, 1
        %s184 = smul.addr %s183, 4
        %s185 = scalar_lea.vmem [#allocation2], %s184
        %p186 = scmp.lt.s32.totalorder %s21, 1
        %s187 = scalar_select %p186, %s21, 1
        %p188 = scmp.lt.s32.totalorder %s22, 2
        %s189 = scalar_select %p188, %s22, 2
        %s190 = smul.addr %s187, 3
        %s191 = sadd.s32 %s189, %s190
        %s192 = smul.addr %s191, 4
        %s193 = scalar_lea.vmem %s2, %s192
        %v195 = vld [vmem:[%s193] sm:$0xf]
        %v196 = vld [vmem:[%s0] sm:$0xf]
        %v197 = vld [vmem:[%s1] sm:$0x1]
        %v199 = vlaneseq
        %v200 = vshrl.u32 %v199, 7
        %v201 = vsub.s32 0, %v200
        %v202 = vrot.slane %v197, %v201
        %vm204 = vcmask 64512
        %v206 = vsel %vm204, %v195, 0
        %vm208 = vcmask 1043456
        %v210 = vsel %vm208, %v196, 0
        %212 = vmatprep.subr.bf16.mxu0 0
        %213 = vmatpush1.bf16.msra.mxu0 0
        %214 = vmatprep.subr.bf16.mxu0 0
        %215 = vmatpush1.bf16.msra.mxu0 0
        %216 = vmatprep.subr.bf16.mxu0 0
        %217 = vmatpush1.bf16.msra.mxu0 0
        %218 = vmatprep.subr.bf16.mxu0 0
        %219 = vmatpush1.bf16.msra.mxu0 0
        %220 = vmatprep.subr.bf16.mxu0 0
        %221 = vmatpush1.bf16.msra.mxu0 0
        %222 = vmatprep.subr.bf16.mxu0 0
        %223 = vmatpush1.bf16.msra.mxu0 0
        %224 = vmatprep.subr.bf16.mxu0 0
        %225 = vmatpush1.bf16.msra.mxu0 0
        %226 = vmatprep.subr.bf16.mxu0 0
        %227 = vmatpush1.bf16.msra.mxu0 %v210
        %228 = vmatprep.subr.bf16.mxu0 0
        %229 = vmatpush2.bf16.msra.mxu0 0
        %230 = vmatprep.subr.bf16.mxu0 0
        %231 = vmatpush2.bf16.msra.mxu0 0
        %232 = vmatprep.subr.bf16.mxu0 0
        %233 = vmatpush2.bf16.msra.mxu0 0
        %234 = vmatprep.subr.bf16.mxu0 0
        %235 = vmatpush2.bf16.msra.mxu0 0
        %236 = vmatprep.subr.bf16.mxu0 0
        %237 = vmatpush2.bf16.msra.mxu0 0
        %238 = vmatprep.subr.bf16.mxu0 0
        %239 = vmatpush2.bf16.msra.mxu0 0
        %240 = vmatprep.subr.bf16.mxu0 0
        %241 = vmatpush2.bf16.msra.mxu0 0
        %242 = vmatprep.subr.bf16.mxu0 0
        %243 = vmatpush2.bf16.msra.mxu0 0
        %244 = vmatprep.mubr.bf16.mxu0 0
        %245 = vmatmul.mubr.bf16.gmra.mxu0 %v206
        %v246 = vpop.f32.mrf.mxu0
        %v247 = vadd.f32 %v202, %v246
        %v248 = vpop.f32.mrf.mxu0
        %v249 = vpop.f32.mrf.mxu0
        %v250 = vpop.f32.mrf.mxu0
        %251 = vdwg.mxu0
        %v252 = vpack.c.bf16 %v247, %v247
        %253 = vst [vmem:[%s185] sm:$0xf] %v252
        %s254 = sand.u32 %s109, 1
        %s255 = scalar_lea.sflag [#allocation3], %s254
        %s256 = sand.u32 %s109, 1
        %s257 = smul.addr %s256, 4
        %s258 = scalar_lea.vmem [#allocation2], %s257
        // Predicated region
        $region33: #{tpu_custom_call.1} parent=31 // pred_check
          %p259 = pneg %p119
        $region34: #{tpu_custom_call.1} parent=31 // pred_check_branch
          %261 = sbr.rel (%p259) target = $region36
        $region35: #{tpu_custom_call.1} parent=31 // pred_region
          %s263 = ssub.s32 64, 64
          %264 = vsyncadd %s255, %s263
          %s265 = smul.addr %s21, 3
          %s266 = sadd.s32 %s22, %s265
          %s267 = smul.addr %s266, 64
          %s268 = scalar_lea.hbm %s3, %s267
          %s270 = sshll.u32 %s258, 4
          %s271 = int_to_ptr.vmem [resolvable:$true] %s270
          %273 = dma.vmem_to_hbm [thread:$0]  %s271, 64, %s268, %s255
        $region36: #{tpu_custom_call.1} parent=31 // pred_fallthru
          _
      $region32: #{tpu_custom_call.1} parent=5 // pred_fallthru
        _
      %p274 = scmp.le.s32.totalorder 2, %s12
      // Predicated region
      $region37: #{tpu_custom_call.1} parent=5 // pred_check
        %p275 = pneg %p274
      $region38: #{tpu_custom_call.1} parent=5 // pred_check_branch
        %277 = sbr.rel (%p275) target = $region40
      $region39: #{tpu_custom_call.1} parent=5 // pred_region
        %s278 = ssub.s32 %s12, 2
        // Predicated region
        $region41: #{tpu_custom_call.1} parent=39 // pred_check
          %p279 = pneg %p125
        $region42: #{tpu_custom_call.1} parent=39 // pred_check_branch
          %281 = sbr.rel (%p279) target = $region44
        $region43: #{tpu_custom_call.1} parent=39 // pred_region
          %s282 = sand.u32 %s110, 1
          %s283 = scalar_lea.sflag [#allocation3], %s282
          %s284 = sand.u32 %s110, 1
          %s285 = smul.addr %s284, 4
          %s286 = scalar_lea.vmem [#allocation2], %s285
          %287 = dma.done %s283, 64
        $region44: #{tpu_custom_call.1} parent=39 // pred_fallthru
          _
      $region40: #{tpu_custom_call.1} parent=5 // pred_fallthru
        _
    $region6: #{tpu_custom_call.1} parent=1 // loop_footer
      %s16 = sadd.s32 1, %s12
    $region7: #{tpu_custom_call.1} parent=1 // loop_footer_branch
      %11 = sbr.rel target = $region3
    $region8: #{tpu_custom_call.1} parent=1 // loop_exit
      _
    %288 = vsyncpa [#allocation3], 1
    %s289 = scalar_lea.sflag [#allocation3], 1
    %290 = vsyncpa %s289, 1

</llo_original>
